<compile_context>
chip_gen: v7x
topology: tpu7x:2x2x1
jax: 0.10.0
libtpu: 0.0.40
codegen_flags: <defaults>
</compile_context>

<pallas_src>
import functools

import jax
import jax.numpy as jnp
from jax.experimental import pallas as pl
from jax.experimental.pallas import tpu as pltpu


def _round_up(v: int, mult: int) -> int:
    return ((v + mult - 1) // mult) * mult


# ----------------------------------------------------------------------------
# Small-problem path: one block, no grid, whole arrays resident in VMEM.
# ----------------------------------------------------------------------------
def _small_matmul_kernel(x_ref, w_ref, o_ref):
    # Single MXU matmul; output ref is already float32, so no cast needed.
    o_ref[...] = jnp.dot(
        x_ref[...], w_ref[...], preferred_element_type=jnp.float32
    )


def _custom_linear_small(x: jax.Array, w: jax.Array) -> jax.Array:
    m, _ = x.shape
    _, n = w.shape
    # No grid / no BlockSpec machinery: Pallas DMAs the full (small) arrays
    # into VMEM once and invokes the body a single time.
    return pl.pallas_call(
        _small_matmul_kernel,
        out_shape=jax.ShapeDtypeStruct((m, n), jnp.float32),
    )(x, w)


# ----------------------------------------------------------------------------
# Scaled-up path: tiled matmul accumulating directly into the f32 output tile.
# ----------------------------------------------------------------------------
def _tiled_matmul_kernel(x_ref, w_ref, o_ref):
    # The output block index is constant across the K ("arbitrary") grid axis,
    # so o_ref stays resident in VMEM and serves as the f32 accumulator.
    @pl.when(pl.program_id(2) == 0)
    def _():
        o_ref[...] = jnp.zeros_like(o_ref)

    o_ref[...] += jnp.dot(
        x_ref[...], w_ref[...], preferred_element_type=jnp.float32
    )


def _pick_tiles(m: int, k: int, n: int) -> tuple[int, int, int]:
    """Pick MXU-aligned tiles: large (512) by default, shrunk to the problem,
    and guaranteeing >= 2 parallel output blocks when possible (v7x 2-TC)."""
    tm = min(512, _round_up(m, 128))
    tn = min(512, _round_up(n, 128))
    tk = min(512, _round_up(k, 128))
    # Make sure both TensorCores (v7x) / megacore partitions get work.
    while pl.cdiv(m, tm) * pl.cdiv(n, tn) < 2:
        if tm > 128:
            tm = max(128, _round_up(tm // 2, 128))
        elif tn > 128:
            tn = max(128, _round_up(tn // 2, 128))
        else:
            break
    return tm, tn, tk


def _custom_linear_tiled(x: jax.Array, w: jax.Array) -> jax.Array:
    m, k = x.shape
    _, n = w.shape

    tm, tn, tk = _pick_tiles(m, k, n)

    # Pad (only when needed) to tile multiples; zero padding is exact for
    # matmul.  allow_input_fusion below lets XLA fuse the pad into the
    # kernel's input DMA pipeline instead of a separate HBM round-trip.
    mp, kp, np_ = _round_up(m, tm), _round_up(k, tk), _round_up(n, tn)
    if (mp, kp) != (m, k):
        x = jnp.pad(x, ((0, mp - m), (0, kp - k)))
    if (kp, np_) != (k, n):
        w = jnp.pad(w, ((0, kp - k), (0, np_ - n)))

    # VMEM footprint: double-buffered A and B input tiles + double-buffered
    # output tile (also the accumulator).  Add headroom for Mosaic internals,
    # cap well below the 64 MiB physical VMEM of a v7x TensorCore.
    tile_bytes = 4 * (2 * (tm * tk + tk * tn) + 2 * tm * tn)
    vmem_limit = min(48 * 1024 * 1024, tile_bytes + (16 << 20))

    cost = pl.CostEstimate(
        flops=2 * mp * np_ * kp,
        transcendentals=0,
        bytes_accessed=4 * (mp * kp + kp * np_ + mp * np_),
    )

    out = pl.pallas_call(
        _tiled_matmul_kernel,
        out_shape=jax.ShapeDtypeStruct((mp, np_), jnp.float32),
        grid_spec=pltpu.PrefetchScalarGridSpec(
            num_scalar_prefetch=0,
            grid=(mp // tm, np_ // tn, kp // tk),
            in_specs=[
                pl.BlockSpec((tm, tk), lambda i, j, kk: (i, kk)),
                pl.BlockSpec((tk, tn), lambda i, j, kk: (kk, j)),
            ],
            out_specs=pl.BlockSpec((tm, tn), lambda i, j, kk: (i, j)),
        ),
        compiler_params=pltpu.CompilerParams(
            dimension_semantics=("parallel", "parallel", "arbitrary"),
            vmem_limit_bytes=vmem_limit,
            allow_input_fusion=[True, True],
        ),
        cost_estimate=cost,
    )(x, w)

    if (mp, np_) != (m, n):
        out = out[:m, :n]
    return out


# ----------------------------------------------------------------------------
# Public entry point: out = x @ w  (forward of customLinear)
# ----------------------------------------------------------------------------
@functools.partial(jax.jit, static_argnames=())
def custom_linear(x: jax.Array, w: jax.Array) -> jax.Array:
    m, k = x.shape
    k2, n = w.shape
    assert k == k2, "feature dimension mismatch"
    # Problems up to 512 per dim fit trivially in VMEM as a single block
    # (x + w + out ~ 3 MiB f32); grid machinery would only add per-step
    # overhead and pad/slice HBM traffic.
    if m <= 512 and n <= 512 and k <= 512:
        return _custom_linear_small(x, w)
    return _custom_linear_tiled(x, w)


if __name__ == "__main__":
    # Shapes implied by the module: inputData = torch.rand(10, 6),
    # customWeights maps 6 feature columns -> 8 output features.
    examples = 10
    feature_columns = 6
    out_features = 8

    key = jax.random.PRNGKey(0)
    kx, kw, kx2, kw2, kx3, kw3 = jax.random.split(key, 6)

    # Deterministic stand-ins for customFunction.getDataRandom / nn.Parameter.
    input_data = jax.random.uniform(
        kx, (examples, feature_columns), dtype=jnp.float32
    )
    custom_weights = jax.random.uniform(
        kw, (feature_columns, out_features), dtype=jnp.float32
    )

    # --- forward pass at the module's literal (tiny) size ---
    out = custom_linear(input_data, custom_weights)
    out = jax.block_until_ready(out)
    ref = input_data @ custom_weights
    assert out.shape == (examples, out_features)
    assert jnp.allclose(out, ref, atol=1e-5, rtol=1e-5)

    # --- exercise the tiled path at an aligned size (no padding) ---
    x_big = jax.random.uniform(kx2, (1024, 512), dtype=jnp.float32)
    w_big = jax.random.uniform(kw2, (512, 1024), dtype=jnp.float32)
    out_big = jax.block_until_ready(custom_linear(x_big, w_big))
    ref_big = x_big @ w_big
    assert out_big.shape == (1024, 1024)
    assert jnp.allclose(out_big, ref_big, atol=1e-3, rtol=1e-4)

    # --- exercise the tiled path with padding on every dim ---
    x_odd = jax.random.uniform(kx3, (600, 300), dtype=jnp.float32)
    w_odd = jax.random.uniform(kw3, (300, 700), dtype=jnp.float32)
    out_odd = jax.block_until_ready(custom_linear(x_odd, w_odd))
    ref_odd = x_odd @ w_odd
    assert out_odd.shape == (600, 700)
    assert jnp.allclose(out_odd, ref_odd, atol=1e-3, rtol=1e-4)

    # TODO(synk): the original module's __init__/print statements are not
    # well-formed PyTorch (nn.Parameters typo, undefined customFunction,
    # printing self.inputData); only the forward `inputData @ customWeights`
    # is implemented here.
    print("KERNEL_OK")
</pallas_src>

<mosaic_0001>
module attributes {stable_mosaic.version = 11 : i64} {
  func.func @_small_matmul_kernel(%arg0: memref<10x6xf32, #tpu.memory_space<vmem>>, %arg1: memref<6x8xf32, #tpu.memory_space<vmem>>, %arg2: memref<10x8xf32, #tpu.memory_space<vmem>>) attributes {dimension_semantics = [], scalar_prefetch = 0 : i64, scratch_operands = 0 : i64, tpu.core_type = #tpu.core_type<tc>} {
    %c0 = arith.constant 0 : index
    %c0_0 = arith.constant 0 : index
    %0 = vector.load %arg0[%c0, %c0_0] : memref<10x6xf32, #tpu.memory_space<vmem>>, vector<10x6xf32>
    %c0_1 = arith.constant 0 : index
    %c0_2 = arith.constant 0 : index
    %1 = vector.load %arg1[%c0_1, %c0_2] : memref<6x8xf32, #tpu.memory_space<vmem>>, vector<6x8xf32>
    %cst = arith.constant dense<0.000000e+00> : vector<10x8xf32>
    %2 = tpu.matmul %0, %1, %cst {dimension_numbers = #tpu.dot_dimension_numbers<[1], [0], [0], [1], [0, 0, 1, 1], [], []>} : vector<10x6xf32>, vector<6x8xf32>, vector<10x8xf32> -> vector<10x8xf32>
    %c0_3 = arith.constant 0 : index
    %c0_4 = arith.constant 0 : index
    %3 = vector.load %arg2[%c0_3, %c0_4] : memref<10x8xf32, #tpu.memory_space<vmem>>, vector<10x8xf32>
    tpu.vector_store %arg2[%c0_3, %c0_4], %2 {strides = array<i32>} : memref<10x8xf32, #tpu.memory_space<vmem>>, vector<10x8xf32>,
    return
  }
}

</mosaic_0001>

<llo_original>
// kernel: custom_linear.1
$region0: #{custom_linear.1}
  #allocation0 [shape = 'u32[]', space=smem, size = 0x4, offset = 0x4, fixed_abs, tag = 'smem constant byte address 0x4 - core index']
  #allocation1 [shape = 'u32[144,128]{1,0:T(1,128)}', space=vmem, size = 0x12000, scoped, tag = 'internal scratch']
  %s0 = inlined_call_operand.vmem [shape: f32[10,6], index: 0, kind: input, shape index: {}]
  %s1 = inlined_call_operand.vmem [shape: f32[6,8], index: 1, kind: input, shape index: {}]
  %s2 = inlined_call_operand.vmem [shape: f32[10,8], index: 2, kind: output, shape index: {}]
  %s3 = sld [smem:[#allocation0]]
  $region18: #{custom_linear.1} parent=0
    _
  %s5 = ssub.s32 1, %s3
  %s6 = scalar_select 0, %s5, %s3
  // Predicated region
  $region2: #{custom_linear.1} parent=0 // pred_check
    _
  $region3: #{custom_linear.1} parent=0 // pred_check_branch
    %8 = sbr.rel (0) target = $region5
  $region4: #{custom_linear.1} parent=0 // pred_region
    _
  $region5: #{custom_linear.1} parent=0 // pred_fallthru
    _
  // Predicated region
  $region6: #{custom_linear.1} parent=0 // pred_check
    _
  $region7: #{custom_linear.1} parent=0 // pred_check_branch
    %10 = sbr.rel (0) target = $region9
  $region8: #{custom_linear.1} parent=0 // pred_region
    _
  $region9: #{custom_linear.1} parent=0 // pred_fallthru
    _
  %v11 = vld [vmem:[%s0] sm:$0xff]
  %v12 = vld [vmem:[%s0 + $0x8] sm:$0x3]
  %v13 = vld [vmem:[%s1] sm:$0x3f]
  %vm14 = vcmask 48128
  %v16 = vsel %vm14, %v11, 0
  %v19 = vsel %vm14, %v12, 0
  %vm21 = vcmask 1045504
  %v23 = vsel %vm21, %v13, 0
  %25 = vmatprep.subr.mxu0 0.0
  %26 = vmatpush1.msra.mxu0 %v23
  %27 = vmatprep.subr.mxu0 0.0
  %28 = vmatpush1.msra.mxu0 0.0
  %29 = vmatprep.subr.mxu0 0.0
  %30 = vmatpush1.msra.mxu0 0.0
  %31 = vmatprep.subr.mxu0 0.0
  %32 = vmatpush1.msra.mxu0 0.0
  %33 = vmatprep.subr.mxu0 0.0
  %34 = vmatpush1.msra.mxu0 0.0
  %35 = vmatprep.subr.mxu0 0.0
  %36 = vmatpush1.msra.mxu0 0.0
  %37 = vmatprep.subr.mxu0 0.0
  %38 = vmatpush1.msra.mxu0 0.0
  %39 = vmatprep.subr.mxu0 0.0
  %40 = vmatpush1.msra.mxu0 0.0
  %41 = vmatprep.subr.mxu0 0.0
  %42 = vmatpush1.msra.mxu0 0.0
  %43 = vmatprep.subr.mxu0 0.0
  %44 = vmatpush1.msra.mxu0 0.0
  %45 = vmatprep.subr.mxu0 0.0
  %46 = vmatpush1.msra.mxu0 0.0
  %47 = vmatprep.subr.mxu0 0.0
  %48 = vmatpush1.msra.mxu0 0.0
  %49 = vmatprep.subr.mxu0 0.0
  %50 = vmatpush1.msra.mxu0 0.0
  %51 = vmatprep.subr.mxu0 0.0
  %52 = vmatpush1.msra.mxu0 0.0
  %53 = vmatprep.subr.mxu0 0.0
  %54 = vmatpush1.msra.mxu0 0.0
  %55 = vmatprep.subr.mxu0 0.0
  %56 = vmatpush1.msra.mxu0 0.0
  %57 = vmatprep.subr.mxu0 0.0
  %58 = vmatpush1.msra.mxu0 0.0
  %59 = vmatprep.subr.mxu0 0.0
  %60 = vmatpush1.msra.mxu0 0.0
  %61 = vmatprep.subr.mxu0 0.0
  %62 = vmatpush1.msra.mxu0 0.0
  %63 = vmatprep.subr.mxu0 0.0
  %64 = vmatpush1.msra.mxu0 0.0
  %65 = vmatprep.subr.mxu0 0.0
  %66 = vmatpush1.msra.mxu0 0.0
  %67 = vmatprep.subr.mxu0 0.0
  %68 = vmatpush1.msra.mxu0 0.0
  %69 = vmatprep.subr.mxu0 0.0
  %70 = vmatpush1.msra.mxu0 0.0
  %71 = vmatprep.subr.mxu0 0.0
  %72 = vmatpush1.msra.mxu0 0.0
  %73 = vmatprep.subr.mxu0 0.0
  %74 = vmatpush1.msra.mxu0 0.0
  %75 = vmatprep.subr.mxu0 0.0
  %76 = vmatpush1.msra.mxu0 0.0
  %77 = vmatprep.subr.mxu0 0.0
  %78 = vmatpush1.msra.mxu0 0.0
  %79 = vmatprep.subr.mxu0 0.0
  %80 = vmatpush1.msra.mxu0 0.0
  %81 = vmatprep.subr.mxu0 0.0
  %82 = vmatpush1.msra.mxu0 0.0
  %83 = vmatprep.subr.mxu0 0.0
  %84 = vmatpush1.msra.mxu0 0.0
  %85 = vmatprep.subr.mxu0 0.0
  %86 = vmatpush1.msra.mxu0 0.0
  %87 = vmatprep.subr.mxu0 0.0
  %88 = vmatpush1.msra.mxu0 0.0
  %89 = vmatprep.mubr.f32.mxu0 0.0
  %90 = vmatmul.mubr.f32.gmra.mrb[0].mxu0 %v16
  %v91 = vpop.f32.mrb[0].mxu0
  %v92 = vadd.f32 0.0, %v91
  %v93 = vpop.f32.mrb[0].mxu0
  %94 = vmatprep.mubr.f32.mxu0 0.0
  %95 = vmatmul.mubr.f32.gmra.mrb[0].mxu0 %v19
  %v96 = vpop.f32.mrb[0].mxu0
  %v97 = vadd.f32 0.0, %v96
  %v98 = vpop.f32.mrb[0].mxu0
  %99 = vdwg.mxu0
  %vm100 = vcmask 64512
  %101 = vst.msk [vmem:[%s2] sm:$0xff] %vm100, %v92
  %vm102 = vcmask 58368
  %103 = vst.msk [vmem:[%s2 + $0x8] sm:$0x3] %vm102, %v97
  // Predicated region
  $region10: #{custom_linear.1} parent=0 // pred_check
    _
  $region11: #{custom_linear.1} parent=0 // pred_check_branch
    %105 = sbr.rel (0) target = $region13
  $region12: #{custom_linear.1} parent=0 // pred_region
    _
  $region13: #{custom_linear.1} parent=0 // pred_fallthru
    _
  // Predicated region
  $region14: #{custom_linear.1} parent=0 // pred_check
    _
  $region15: #{custom_linear.1} parent=0 // pred_check_branch
    %107 = sbr.rel (0) target = $region17
  $region16: #{custom_linear.1} parent=0 // pred_region
    _
  $region17: #{custom_linear.1} parent=0 // pred_fallthru
    _

</llo_original>
